<compile_context>
chip_gen: v6e
topology: v6e:2x2x1
jax: 0.10.0
libtpu: 0.0.40
codegen_flags: <defaults>
</compile_context>

<pallas_src>
import functools

import jax
import jax.numpy as jnp
from jax import lax
from jax.experimental import pallas as pl
from jax.experimental.pallas import tpu as pltpu


def make_grid(grid_size: int) -> jnp.ndarray:
    """S x S grid-cell boxes in tl_br format, normalized to [0, 1].  Shape [G, 4]."""
    s = grid_size
    ii, jj = jnp.meshgrid(jnp.arange(s), jnp.arange(s), indexing="ij")
    x0 = jj / s
    y0 = ii / s
    x1 = (jj + 1) / s
    y1 = (ii + 1) / s
    return jnp.stack([x0, y0, x1, y1], axis=-1).reshape(-1, 4).astype(jnp.float32)


def yolo_class_loss_kernel(grid_ref, pred_ref, gt_ref, out_ref, *, label_modulus, pred_is_cg):
    grid3 = grid_ref[...]                 # [1, 4, G]  f32 grid-cell boxes (rows: x0,y0,x1,y1)
    gt = gt_ref[...]                      # [TB, M, 5] f32: x0,y0,x1,y1,label
    pred = pred_ref[...]                  # [TB, C, G] (cg) or [TB, G, C] (gc)
    if pred_is_cg:
        logits = pred                                    # [TB, C, G], native dtype
    else:
        logits = pltpu.einshape("bgc->bcg", pred)        # in-kernel relayout on the XLU
    C = logits.shape[1]
    M = gt.shape[1]

    # Grid-cell coords, broadcast over (batch, gt): [1, 1, G]; cells stay lane-dense.
    gx0 = grid3[:, 0:1, :]
    gy0 = grid3[:, 1:2, :]
    gx1 = grid3[:, 2:3, :]
    gy1 = grid3[:, 3:4, :]

    # gt-box coords / labels: [TB, M, 1]
    bx0 = gt[:, :, 0:1]
    by0 = gt[:, :, 1:2]
    bx1 = gt[:, :, 2:3]
    by1 = gt[:, :, 3:4]
    labels = gt[:, :, 4:5].astype(jnp.int32)

    # ---- IoU(grid cell, gt box): [TB, M, G], M on sublanes, cells on lanes ----
    iw = jnp.maximum(jnp.minimum(gx1, bx1) - jnp.maximum(gx0, bx0), 0.0)
    ih = jnp.maximum(jnp.minimum(gy1, by1) - jnp.maximum(gy0, by0), 0.0)
    inter = iw * ih                                      # [TB, M, G]
    area_g = (gx1 - gx0) * (gy1 - gy0)                   # [1, 1, G]   (> 0 for grid cells)
    area_b = (bx1 - bx0) * (by1 - by0)                   # [TB, M, 1]
    # Exact divide keeps IoU argmax tie-breaks bit-identical to the f32 reference.
    iou = inter / (area_g + area_b - inter)              # [TB, M, G]
    max_iou = jnp.max(iou, axis=1, keepdims=True)        # [TB, 1, G]

    # ---- fused first-occurrence argmax over gt boxes + label pick ----
    K = label_modulus                                    # static power of two >= num classes
    m_iota = lax.broadcasted_iota(jnp.int32, (1, M, 1), 1)
    key = m_iota * K + labels                            # [TB, M, 1], strictly increasing in m
    big = jnp.int32(M * K)
    key_min = jnp.min(jnp.where(iou == max_iou, key, big), axis=1, keepdims=True)   # [TB, 1, G]
    target = jnp.bitwise_and(key_min, K - 1)             # [TB, 1, G] label of first best box

    has_match = max_iou > 0.0                            # [TB, 1, G]  (same predicate as reference)

    # ---- cross entropy per cell: logsumexp(logits) - logits[target], reduce over C sublanes ----
    lmax = jnp.max(logits, axis=1, keepdims=True)                      # native dtype (bf16 stays bf16)
    shifted = (logits - lmax).astype(jnp.float32)
    lse = lmax.astype(jnp.float32) + jnp.log(
        jnp.sum(jnp.exp(shifted), axis=1, keepdims=True))              # [TB, 1, G] f32
    c_iota = lax.broadcasted_iota(jnp.int32, (1, C, 1), 1)
    onehot = c_iota == target                                          # [TB, C, G]
    tgt_logit = jnp.sum(jnp.where(onehot, logits, 0),
                        axis=1, keepdims=True).astype(jnp.float32)     # [TB, 1, G]
    ce = lse - tgt_logit                                               # [TB, 1, G]

    # ---- per-image partial loss: masked sum over this block's cells (one lane reduce / image) ----
    masked = jnp.where(has_match, ce, 0.0)               # [TB, 1, G]
    out_ref[...] = jnp.sum(masked, axis=2)               # [TB, 1]


def yolo_class_loss(grid, pred_logits, gt_boxes, gt_labels, *, block_b=64,
                    transpose_in_kernel=False, core_parallel=False,
                    vmem_limit_bytes=32 * 1024 * 1024):
    """YOLOv1 classification loss.

    grid:        [G, 4] f32 grid-cell boxes (tl_br).
    pred_logits: [B, G, C] f32 or bf16 per-cell class logits.
    gt_boxes:    [B, M, 4] f32 tl_br (pad with zero-area boxes for ragged images).
    gt_labels:   [B, M]    int class ids.

    VMEM: after (8,128) tile padding each image costs ~100-150 KB of intermediates, so
    block_b=64 ~= 8-9 MB.  v7x (64 MiB physical / 32 MiB scoped) tops out around
    block_b ~128-192; v5e/v6e (128 MiB physical) can take block_b ~256+ with
    vmem_limit_bytes raised.  core_parallel=True is the v7x (2 TensorCores) lever.
    """
    B, G, C = pred_logits.shape
    M = gt_boxes.shape[1]
    assert grid.shape == (G, 4)

    block_b = max(1, min(block_b, B))
    num_blocks = pl.cdiv(B, block_b)
    K = pl.next_power_of_2(C)            # label modulus for the fused argmax+label key

    # Tiny layout plumbing (grid is G*4 floats, gt stream is B*M*5 floats).
    grid_t = jnp.transpose(grid.astype(jnp.float32), (1, 0))[None]          # [1, 4, G]
    gtc = jnp.concatenate(
        [gt_boxes.astype(jnp.float32), gt_labels.astype(jnp.float32)[..., None]],
        axis=-1)                                                             # [B, M, 5]

    if transpose_in_kernel:
        pred_in = pred_logits                                                # [B, G, C]
        pred_spec = pl.BlockSpec((block_b, G, C), lambda b: (b, 0, 0))
    else:
        # One extra XLA pass over pred; usually folded into the producer inside a jitted step.
        pred_in = jnp.transpose(pred_logits, (0, 2, 1))                      # [B, C, G]
        pred_spec = pl.BlockSpec((block_b, C, G), lambda b: (b, 0, 0))

    sem = pltpu.CORE_PARALLEL if core_parallel else "parallel"

    kernel = functools.partial(
        yolo_class_loss_kernel, label_modulus=K, pred_is_cg=not transpose_in_kernel)

    # Per-image partial losses; the (padded) last block's garbage rows are sliced off below,
    # so no input padding pass is ever needed for ragged B.
    per_image = pl.pallas_call(
        kernel,
        out_shape=jax.ShapeDtypeStruct((num_blocks, block_b, 1), jnp.float32),
        grid_spec=pltpu.PrefetchScalarGridSpec(
            num_scalar_prefetch=0,
            grid=(num_blocks,),
            in_specs=[
                pl.BlockSpec((1, 4, G), lambda b: (0, 0, 0)),        # grid boxes (constant)
                pred_spec,                                           # logits tile
                pl.BlockSpec((block_b, M, 5), lambda b: (b, 0, 0)),  # merged gt boxes+labels
            ],
            out_specs=pl.BlockSpec((None, block_b, 1), lambda b: (b, 0, 0)),
        ),
        compiler_params=pltpu.CompilerParams(
            dimension_semantics=(sem,),
            vmem_limit_bytes=vmem_limit_bytes,
        ),
    )(grid_t, pred_in, gtc)

    return jnp.sum(per_image.reshape(-1)[:B])


# -------------------- pure-JAX reference (mirrors the PyTorch forward) --------------------
def _iou_tl_br(a, b):
    lt = jnp.maximum(a[:, None, :2], b[None, :, :2])
    rb = jnp.minimum(a[:, None, 2:], b[None, :, 2:])
    wh = jnp.clip(rb - lt, 0.0)
    inter = wh[..., 0] * wh[..., 1]
    area_a = (a[:, 2] - a[:, 0]) * (a[:, 3] - a[:, 1])
    area_b = (b[:, 2] - b[:, 0]) * (b[:, 3] - b[:, 1])
    return inter / (area_a[:, None] + area_b[None, :] - inter)


def reference_loss(grid, pred_logits, gt_boxes, gt_labels):
    total = jnp.float32(0.0)
    for b in range(pred_logits.shape[0]):
        iou = _iou_tl_br(grid, gt_boxes[b])
        max_iou = jnp.max(iou, axis=1)
        idx = jnp.argmax(iou, axis=1)
        tgt = gt_labels[b][idx]
        logits = pred_logits[b].astype(jnp.float32)
        lse = jax.scipy.special.logsumexp(logits, axis=1)
        ce = lse - jnp.take_along_axis(logits, tgt[:, None], axis=1)[:, 0]
        total = total + jnp.sum(jnp.where(max_iou > 0.0, ce, 0.0))
    return total


if __name__ == "__main__":
    key = jax.random.PRNGKey(0)

    def make_inputs(k, B, S, C, M):
        grid = make_grid(S)
        G = S * S
        k1, k2, k3, k4 = jax.random.split(k, 4)
        pred = jax.random.normal(k1, (B, G, C), dtype=jnp.float32)
        xy0 = jax.random.uniform(k2, (B, M, 2), minval=0.0, maxval=0.7)
        wh = jax.random.uniform(k3, (B, M, 2), minval=0.1, maxval=0.3)
        boxes = jnp.concatenate([xy0, xy0 + wh], axis=-1).astype(jnp.float32)   # [B, M, 4]
        labels = jax.random.randint(k4, (B, M), 0, C, dtype=jnp.int32)          # [B, M]
        return grid, pred, boxes, labels

    k1, k2 = jax.random.split(key)

    # Small config: B=2, S=4 (16 cells), 8 classes, 4 gt boxes/image -> single block.
    inputs1 = make_inputs(k1, B=2, S=4, C=8, M=4)
    loss1 = yolo_class_loss(*inputs1)
    jax.block_until_ready(loss1)
    ref1 = reference_loss(*inputs1)
    assert jnp.allclose(loss1, ref1, rtol=1e-4, atol=1e-4), (loss1, ref1)

    # Multi-block config exercising batch tiling + ragged (unpadded) last block:
    # B=5, S=7 (49 cells), 20 classes, block_b=4 -> 2 blocks, second one partial.
    inputs2 = make_inputs(k2, B=5, S=7, C=20, M=6)
    loss2 = yolo_class_loss(*inputs2, block_b=4)
    jax.block_until_ready(loss2)
    ref2 = reference_loss(*inputs2)
    assert jnp.allclose(loss2, ref2, rtol=1e-4, atol=1e-4), (loss2, ref2)

    print("KERNEL_OK")
</pallas_src>

<mosaic_0001>
module attributes {stable_mosaic.version = 11 : i64} {
  func.func @yolo_class_loss_kernel(%arg0: i32, %arg1: memref<1x4x16xf32, #tpu.memory_space<vmem>>, %arg2: memref<2x8x16xf32, #tpu.memory_space<vmem>>, %arg3: memref<2x4x5xf32, #tpu.memory_space<vmem>>, %arg4: memref<1x2x1xf32, #tpu.memory_space<vmem>>) attributes {dimension_semantics = [#tpu.dimension_semantics<parallel>], iteration_bounds = array<i64: 1>, scalar_prefetch = 0 : i64, scratch_operands = 0 : i64, tpu.core_type = #tpu.core_type<tc>, window_params = [{pipeline_mode = #tpu.pipeline_mode<synchronous>, transform_indices = @transform_0, window_bounds = array<i64: 1, 4, 16>}, {transform_indices = @transform_1, window_bounds = array<i64: 2, 8, 16>}, {transform_indices = @transform_2, window_bounds = array<i64: 2, 4, 5>}, {transform_indices = @transform_3, window_bounds = array<i64: 1, 2, 1>}]} {
    %c0 = arith.constant 0 : index
    %c0_0 = arith.constant 0 : index
    %c0_1 = arith.constant 0 : index
    %0 = vector.load %arg1[%c0, %c0_0, %c0_1] : memref<1x4x16xf32, #tpu.memory_space<vmem>>, vector<1x4x16xf32>
    %c0_2 = arith.constant 0 : index
    %c0_3 = arith.constant 0 : index
    %c0_4 = arith.constant 0 : index
    %1 = vector.load %arg3[%c0_2, %c0_3, %c0_4] : memref<2x4x5xf32, #tpu.memory_space<vmem>>, vector<2x4x5xf32>
    %c0_5 = arith.constant 0 : index
    %c0_6 = arith.constant 0 : index
    %c0_7 = arith.constant 0 : index
    %2 = vector.load %arg2[%c0_5, %c0_6, %c0_7] : memref<2x8x16xf32, #tpu.memory_space<vmem>>, vector<2x8x16xf32>
    %3 = vector.extract_strided_slice %0 {offsets = [0, 0, 0], sizes = [1, 1, 16], strides = [1, 1, 1]} : vector<1x4x16xf32> to vector<1x1x16xf32>
    %4 = vector.extract_strided_slice %0 {offsets = [0, 1, 0], sizes = [1, 1, 16], strides = [1, 1, 1]} : vector<1x4x16xf32> to vector<1x1x16xf32>
    %5 = vector.extract_strided_slice %0 {offsets = [0, 2, 0], sizes = [1, 1, 16], strides = [1, 1, 1]} : vector<1x4x16xf32> to vector<1x1x16xf32>
    %6 = vector.extract_strided_slice %0 {offsets = [0, 3, 0], sizes = [1, 1, 16], strides = [1, 1, 1]} : vector<1x4x16xf32> to vector<1x1x16xf32>
    %7 = vector.extract_strided_slice %1 {offsets = [0, 0, 0], sizes = [2, 4, 1], strides = [1, 1, 1]} : vector<2x4x5xf32> to vector<2x4x1xf32>
    %8 = vector.extract_strided_slice %1 {offsets = [0, 0, 1], sizes = [2, 4, 1], strides = [1, 1, 1]} : vector<2x4x5xf32> to vector<2x4x1xf32>
    %9 = vector.extract_strided_slice %1 {offsets = [0, 0, 2], sizes = [2, 4, 1], strides = [1, 1, 1]} : vector<2x4x5xf32> to vector<2x4x1xf32>
    %10 = vector.extract_strided_slice %1 {offsets = [0, 0, 3], sizes = [2, 4, 1], strides = [1, 1, 1]} : vector<2x4x5xf32> to vector<2x4x1xf32>
    %11 = vector.extract_strided_slice %1 {offsets = [0, 0, 4], sizes = [2, 4, 1], strides = [1, 1, 1]} : vector<2x4x5xf32> to vector<2x4x1xf32>
    %12 = arith.fptosi %11 : vector<2x4x1xf32> to vector<2x4x1xi32>
    %13 = vector.broadcast %5 : vector<1x1x16xf32> to vector<2x4x16xf32>
    %14 = vector.broadcast %9 : vector<2x4x1xf32> to vector<2x4x16xf32>
    %15 = arith.minimumf %13, %14 : vector<2x4x16xf32>
    %16 = vector.broadcast %3 : vector<1x1x16xf32> to vector<2x4x16xf32>
    %17 = vector.broadcast %7 : vector<2x4x1xf32> to vector<2x4x16xf32>
    %18 = arith.maximumf %16, %17 : vector<2x4x16xf32>
    %19 = arith.subf %15, %18 : vector<2x4x16xf32>
    %cst = arith.constant 0.000000e+00 : f32
    %20 = vector.broadcast %cst : f32 to vector<2x4x16xf32>
    %21 = arith.maximumf %19, %20 : vector<2x4x16xf32>
    %22 = vector.broadcast %6 : vector<1x1x16xf32> to vector<2x4x16xf32>
    %23 = vector.broadcast %10 : vector<2x4x1xf32> to vector<2x4x16xf32>
    %24 = arith.minimumf %22, %23 : vector<2x4x16xf32>
    %25 = vector.broadcast %4 : vector<1x1x16xf32> to vector<2x4x16xf32>
    %26 = vector.broadcast %8 : vector<2x4x1xf32> to vector<2x4x16xf32>
    %27 = arith.maximumf %25, %26 : vector<2x4x16xf32>
    %28 = arith.subf %24, %27 : vector<2x4x16xf32>
    %cst_8 = arith.constant 0.000000e+00 : f32
    %29 = vector.broadcast %cst_8 : f32 to vector<2x4x16xf32>
    %30 = arith.maximumf %28, %29 : vector<2x4x16xf32>
    %31 = arith.mulf %21, %30 : vector<2x4x16xf32>
    %32 = arith.subf %5, %3 : vector<1x1x16xf32>
    %33 = arith.subf %6, %4 : vector<1x1x16xf32>
    %34 = arith.mulf %32, %33 : vector<1x1x16xf32>
    %35 = arith.subf %9, %7 : vector<2x4x1xf32>
    %36 = arith.subf %10, %8 : vector<2x4x1xf32>
    %37 = arith.mulf %35, %36 : vector<2x4x1xf32>
    %38 = vector.broadcast %34 : vector<1x1x16xf32> to vector<2x4x16xf32>
    %39 = vector.broadcast %37 : vector<2x4x1xf32> to vector<2x4x16xf32>
    %40 = arith.addf %38, %39 : vector<2x4x16xf32>
    %41 = arith.subf %40, %31 : vector<2x4x16xf32>
    %42 = arith.divf %31, %41 : vector<2x4x16xf32>
    %cst_9 = arith.constant dense<0xFF800000> : vector<2x16xf32>
    %43 = vector.multi_reduction <maximumf>, %42, %cst_9 [1] : vector<2x4x16xf32> to vector<2x16xf32>
    %44 = vector.shape_cast %43 : vector<2x16xf32> to vector<2x1x16xf32>
    %45 = tpu.iota {dimensions = array<i32: 1>} : vector<1x4x1xi32>
    %c8_i32 = arith.constant 8 : i32
    %46 = vector.broadcast %c8_i32 : i32 to vector<1x4x1xi32>
    %47 = arith.muli %45, %46 : vector<1x4x1xi32>
    %48 = vector.broadcast %47 : vector<1x4x1xi32> to vector<2x4x1xi32>
    %49 = arith.addi %48, %12 : vector<2x4x1xi32>
    %50 = vector.broadcast %44 : vector<2x1x16xf32> to vector<2x4x16xf32>
    %51 = arith.cmpf oeq, %42, %50 : vector<2x4x16xf32>
    %c32_i32 = arith.constant 32 : i32
    %52 = vector.shape_cast %49 : vector<2x4x1xi32> to vector<2x4x1xi32>
    %53 = vector.broadcast %52 : vector<2x4x1xi32> to vector<2x4x16xi32>
    %54 = vector.broadcast %c32_i32 : i32 to vector<2x4x16xi32>
    %55 = arith.select %51, %53, %54 : vector<2x4x16xi1>, vector<2x4x16xi32>
    %cst_10 = arith.constant dense<2147483647> : vector<2x16xi32>
    %56 = vector.multi_reduction <minsi>, %55, %cst_10 [1] : vector<2x4x16xi32> to vector<2x16xi32>
    %57 = vector.shape_cast %56 : vector<2x16xi32> to vector<2x1x16xi32>
    %c7_i32 = arith.constant 7 : i32
    %58 = vector.broadcast %c7_i32 : i32 to vector<2x1x16xi32>
    %59 = arith.andi %57, %58 : vector<2x1x16xi32>
    %cst_11 = arith.constant 0.000000e+00 : f32
    %60 = vector.broadcast %cst_11 : f32 to vector<2x1x16xf32>
    %61 = arith.cmpf ogt, %44, %60 : vector<2x1x16xf32>
    %cst_12 = arith.constant dense<0xFF800000> : vector<2x16xf32>
    %62 = vector.multi_reduction <maximumf>, %2, %cst_12 [1] : vector<2x8x16xf32> to vector<2x16xf32>
    %63 = vector.shape_cast %62 : vector<2x16xf32> to vector<2x1x16xf32>
    %64 = vector.broadcast %63 : vector<2x1x16xf32> to vector<2x8x16xf32>
    %65 = arith.subf %2, %64 : vector<2x8x16xf32>
    %66 = math.exp %65 : vector<2x8x16xf32>
    %cst_13 = arith.constant dense<0.000000e+00> : vector<2x16xf32>
    %67 = vector.multi_reduction <add>, %66, %cst_13 [1] : vector<2x8x16xf32> to vector<2x16xf32>
    %68 = vector.shape_cast %67 : vector<2x16xf32> to vector<2x1x16xf32>
    %69 = math.log %68 : vector<2x1x16xf32>
    %70 = arith.addf %63, %69 : vector<2x1x16xf32>
    %71 = tpu.iota {dimensions = array<i32: 1>} : vector<1x8x1xi32>
    %72 = vector.broadcast %71 : vector<1x8x1xi32> to vector<2x8x16xi32>
    %73 = vector.broadcast %59 : vector<2x1x16xi32> to vector<2x8x16xi32>
    %74 = arith.cmpi eq, %72, %73 : vector<2x8x16xi32>
    %c0_i32 = arith.constant 0 : i32
    %75 = arith.sitofp %c0_i32 : i32 to f32
    %76 = vector.broadcast %75 : f32 to vector<2x8x16xf32>
    %77 = arith.select %74, %2, %76 : vector<2x8x16xi1>, vector<2x8x16xf32>
    %cst_14 = arith.constant dense<0.000000e+00> : vector<2x16xf32>
    %78 = vector.multi_reduction <add>, %77, %cst_14 [1] : vector<2x8x16xf32> to vector<2x16xf32>
    %79 = vector.shape_cast %78 : vector<2x16xf32> to vector<2x1x16xf32>
    %80 = arith.subf %70, %79 : vector<2x1x16xf32>
    %cst_15 = arith.constant 0.000000e+00 : f32
    %81 = vector.broadcast %cst_15 : f32 to vector<2x1x16xf32>
    %82 = arith.select %61, %80, %81 : vector<2x1x16xi1>, vector<2x1x16xf32>
    %cst_16 = arith.constant dense<0.000000e+00> : vector<2x1xf32>
    %83 = vector.multi_reduction <add>, %82, %cst_16 [2] : vector<2x1x16xf32> to vector<2x1xf32>
    %c0_17 = arith.constant 0 : index
    %c0_18 = arith.constant 0 : index
    %c0_19 = arith.constant 0 : index
    %84 = vector.load %arg4[%c0_17, %c0_18, %c0_19] : memref<1x2x1xf32, #tpu.memory_space<vmem>>, vector<1x2x1xf32>
    %85 = vector.shape_cast %84 : vector<1x2x1xf32> to vector<2x1xf32>
    %86 = vector.shape_cast %83 : vector<2x1xf32> to vector<1x2x1xf32>
    tpu.vector_store %arg4[%c0_17, %c0_18, %c0_19], %86 {strides = array<i32>} : memref<1x2x1xf32, #tpu.memory_space<vmem>>, vector<1x2x1xf32>,
    return
  }
  func.func @transform_0(%arg0: i32) -> (i32, i32, i32) {
    %c0_i32 = arith.constant 0 : i32
    %c0_i32_0 = arith.constant 0 : i32
    %c0_i32_1 = arith.constant 0 : i32
    %c0_i32_2 = arith.constant 0 : i32
    return %c0_i32, %c0_i32_0, %c0_i32_1 : i32, i32, i32
  }
  func.func @transform_1(%arg0: i32) -> (i32, i32, i32) {
    %c0_i32 = arith.constant 0 : i32
    %c0_i32_0 = arith.constant 0 : i32
    %c0_i32_1 = arith.constant 0 : i32
    return %arg0, %c0_i32, %c0_i32_0 : i32, i32, i32
  }
  func.func @transform_2(%arg0: i32) -> (i32, i32, i32) {
    %c0_i32 = arith.constant 0 : i32
    %c0_i32_0 = arith.constant 0 : i32
    %c0_i32_1 = arith.constant 0 : i32
    return %arg0, %c0_i32, %c0_i32_0 : i32, i32, i32
  }
  func.func @transform_3(%arg0: i32) -> (i32, i32, i32) {
    %c0_i32 = arith.constant 0 : i32
    %c0_i32_0 = arith.constant 0 : i32
    %c0_i32_1 = arith.constant 0 : i32
    return %arg0, %c0_i32, %c0_i32_0 : i32, i32, i32
  }
}

</mosaic_0001>

<llo_original>
// kernel: tpu_custom_call.1
$region0: #{tpu_custom_call.1}
  #allocation0 [shape = 'u32[]', space=smem, size = 0x4, offset = 0x4, fixed_abs, tag = 'smem constant byte address 0x4 - core index']
  #allocation1 [shape = 'u32[144,128]{1,0:T(1,128)}', space=vmem, size = 0x12000, scoped, tag = 'internal scratch']
  %s0 = inlined_call_operand.hbm [shape: f32[1,4,16], index: 0, kind: input, shape index: {}]
  %s1 = inlined_call_operand.hbm [shape: f32[2,8,16], index: 1, kind: input, shape index: {}]
  %s2 = inlined_call_operand.hbm [shape: f32[2,4,5], index: 2, kind: input, shape index: {}]
  %s3 = inlined_call_operand.vmem [shape: f32[1,2,1], index: 3, kind: output, shape index: {}]
  %s4 = sld [smem:[#allocation0]]
  $region34: #{tpu_custom_call.1} parent=0
    _
  %s6 = ssub.s32 1, %s4
  %s7 = scalar_select 0, %s6, %s4
  $region1: #{tpu_custom_call.1} parent=0
    #allocation2 [shape = 'u8[2048]{0}', space=vmem, size = 0x800, scoped, tag = 'input window, operand 0, single buffered']
    #allocation3 [shape = 's32[1]{0}', space=sflag, size = 0x4, scoped, tag = 'scoped memory for tpu_custom_call.1']
    #allocation4 [shape = 'u8[8192]{0}', space=vmem, size = 0x2000, scoped, tag = 'input window, operand 1, single buffered']
    #allocation5 [shape = 's32[1]{0}', space=sflag, size = 0x4, scoped, tag = 'scoped memory for tpu_custom_call.1']
    #allocation6 [shape = 'u8[4096]{0}', space=vmem, size = 0x1000, scoped, tag = 'input window, operand 2, single buffered']
    %8 = vsyncpa [#allocation3], 0
    %9 = vsyncpa [#allocation5], 0
    // Predicated region
    $region2: #{tpu_custom_call.1} parent=1 // pred_check
      _
    $region3: #{tpu_custom_call.1} parent=1 // pred_check_branch
      %11 = sbr.rel (0) target = $region5
    $region4: #{tpu_custom_call.1} parent=1 // pred_region
      %s13 = ssub.s32 64, 64
      %14 = vsyncadd [#allocation3], %s13
      %s16 = sshll.u32 [#allocation2], 4
      %s17 = int_to_ptr.vmem [resolvable:$true] %s16
      %19 = dma.hbm_to_vmem [thread:$0]  %s0, 64, %s17, [#allocation3]
    $region5: #{tpu_custom_call.1} parent=1 // pred_fallthru
      _
    // Predicated region
    $region6: #{tpu_custom_call.1} parent=1 // pred_check
      _
    $region7: #{tpu_custom_call.1} parent=1 // pred_check_branch
      %21 = sbr.rel (0) target = $region9
    $region8: #{tpu_custom_call.1} parent=1 // pred_region
      %s23 = ssub.s32 256, 256
      %24 = vsyncadd [#allocation5], %s23
      %s25 = sshll.u32 [#allocation4], 4
      %s26 = int_to_ptr.vmem [resolvable:$true] %s25
      %31 = dma.hbm_to_vmem [thread:$0]  %s1, 256, %s26, [#allocation5], 128, 128, 8
    $region9: #{tpu_custom_call.1} parent=1 // pred_fallthru
      _
    // Predicated region
    $region10: #{tpu_custom_call.1} parent=1 // pred_check
      _
    $region11: #{tpu_custom_call.1} parent=1 // pred_check_branch
      %33 = sbr.rel (0) target = $region13
    $region12: #{tpu_custom_call.1} parent=1 // pred_region
      %s35 = ssub.s32 128, 128
      %36 = vsyncadd [#allocation5], %s35
      %s37 = sshll.u32 [#allocation6], 4
      %s38 = int_to_ptr.vmem [resolvable:$true] %s37
      %43 = dma.hbm_to_vmem [thread:$0]  %s2, 128, %s38, [#allocation5], 64, 64, 4
    $region13: #{tpu_custom_call.1} parent=1 // pred_fallthru
      _
    // Predicated region
    $region14: #{tpu_custom_call.1} parent=1 // pred_check
      _
    $region15: #{tpu_custom_call.1} parent=1 // pred_check_branch
      %45 = sbr.rel (0) target = $region17
    $region16: #{tpu_custom_call.1} parent=1 // pred_region
      %46 = dma.done [#allocation3], 64
    $region17: #{tpu_custom_call.1} parent=1 // pred_fallthru
      _
    // Predicated region
    $region18: #{tpu_custom_call.1} parent=1 // pred_check
      _
    $region19: #{tpu_custom_call.1} parent=1 // pred_check_branch
      %48 = sbr.rel (0) target = $region21
    $region20: #{tpu_custom_call.1} parent=1 // pred_region
      %49 = dma.done [#allocation5], 256
    $region21: #{tpu_custom_call.1} parent=1 // pred_fallthru
      _
    // Predicated region
    $region22: #{tpu_custom_call.1} parent=1 // pred_check
      _
    $region23: #{tpu_custom_call.1} parent=1 // pred_check_branch
      %51 = sbr.rel (0) target = $region25
    $region24: #{tpu_custom_call.1} parent=1 // pred_region
      %52 = dma.done [#allocation5], 128
    $region25: #{tpu_custom_call.1} parent=1 // pred_fallthru
      _
    %v53 = vld [vmem:[#allocation2] sm:$0xf]
    %v54 = vld [vmem:[#allocation6] sm:$0xf]
    %v55 = vld [vmem:[#allocation6 + $0x4] sm:$0xf]
    %v56 = vld [vmem:[#allocation4] sm:$0xff]
    %v57 = vld [vmem:[#allocation4 + $0x8] sm:$0xff]
    %v58 = vcvt.f32.s32.to.zero.pseudo %v54
    %v59 = vcvt.f32.s32.to.zero.pseudo %v55
    %v60 = vlaneseq
    %v61 = vshrl.u32 %v60, 7
    %v62 = vsub.s32 2, %v61
    %v63 = vrot.slane %v53, %v62
    %65 = vset.pattern.permute.xlu0 2
    %66 = vperm.xlu0 %65, %v54
    %v67 = vpop.permute.xlu0 %66
    %70 = vset.pattern.permute.xlu0 2
    %71 = vperm.xlu0 %70, %v55
    %v72 = vpop.permute.xlu0 %71
    %v74 = vmin.f32 %v63, %v67
    %v75 = vmin.f32 %v63, %v72
    %v76 = vlaneseq
    %v77 = vshrl.u32 %v76, 7
    %v78 = vsub.s32 0, %v77
    %v79 = vrot.slane %v53, %v78
    %80 = vset.pattern.permute.xlu0 0
    %81 = vperm.xlu0 %80, %v54
    %v82 = vpop.permute.xlu0 %81
    %84 = vset.pattern.permute.xlu0 0
    %85 = vperm.xlu0 %84, %v55
    %v86 = vpop.permute.xlu0 %85
    %v88 = vmax.f32 %v79, %v82
    %v89 = vmax.f32 %v79, %v86
    %v90 = vsub.f32 %v74, %v88
    %v91 = vsub.f32 %v75, %v89
    %v92 = vmax.f32 %v90, 0.0
    %v93 = vmax.f32 %v91, 0.0
    %v94 = vlaneseq
    %v95 = vshrl.u32 %v94, 7
    %v96 = vsub.s32 3, %v95
    %v97 = vrot.slane %v53, %v96
    %98 = vset.pattern.permute.xlu0 3
    %99 = vperm.xlu0 %98, %v54
    %v100 = vpop.permute.xlu0 %99
    %102 = vset.pattern.permute.xlu0 3
    %103 = vperm.xlu0 %102, %v55
    %v104 = vpop.permute.xlu0 %103
    %v106 = vmin.f32 %v97, %v100
    %v107 = vmin.f32 %v97, %v104
    %v108 = vlaneseq
    %v109 = vshrl.u32 %v108, 7
    %v110 = vsub.s32 1, %v109
    %v111 = vrot.slane %v53, %v110
    %112 = vset.pattern.permute.xlu0 1
    %113 = vperm.xlu0 %112, %v54
    %v114 = vpop.permute.xlu0 %113
    %116 = vset.pattern.permute.xlu0 1
    %117 = vperm.xlu0 %116, %v55
    %v118 = vpop.permute.xlu0 %117
    %v120 = vmax.f32 %v111, %v114
    %v121 = vmax.f32 %v111, %v118
    %v122 = vsub.f32 %v106, %v120
    %v123 = vsub.f32 %v107, %v121
    %v124 = vmax.f32 %v122, 0.0
    %v125 = vmax.f32 %v123, 0.0
    %v126 = vmul.f32 %v92, %v124
    %v127 = vmul.f32 %v93, %v125
    %v129 = vrot.slane %v53, 6
    %v131 = vsub.f32 %v53, %v129
    %v133 = vrot.slane %v131, 1
    %v135 = vmul.f32 %v131, %v133
    %136 = vrot.lane.b32.xlu0 %v54, 2
    %v137 = vpop.permute.xlu0 %136
    %138 = vrot.lane.b32.xlu0 %v55, 2
    %v139 = vpop.permute.xlu0 %138
    %v142 = vsub.f32 %v54, %v137
    %v143 = vsub.f32 %v55, %v139
    %146 = vrot.lane.b32.xlu0 %v142, 127
    %v147 = vpop.permute.xlu0 %146
    %148 = vrot.lane.b32.xlu0 %v143, 127
    %v149 = vpop.permute.xlu0 %148
    %v152 = vmul.f32 %v142, %v147
    %v153 = vmul.f32 %v143, %v149
    %v154 = vlaneseq
    %v155 = vshrl.u32 %v154, 7
    %v156 = vsub.s32 2, %v155
    %v157 = vrot.slane %v135, %v156
    %159 = vset.pattern.permute.xlu0 2
    %160 = vperm.xlu0 %159, %v152
    %v161 = vpop.permute.xlu0 %160
    %164 = vset.pattern.permute.xlu0 2
    %165 = vperm.xlu0 %164, %v153
    %v166 = vpop.permute.xlu0 %165
    %v168 = vadd.f32 %v157, %v161
    %v169 = vadd.f32 %v157, %v166
    %v170 = vsub.f32 %v168, %v126
    %v171 = vsub.f32 %v169, %v127
    %v172 = vrcp.pop %v170
    %v173 = vmul.f32 %v126, %v172
    %v174 = vrcp.pop %v171
    %v175 = vmul.f32 %v127, %v174
    %vm176 = vcmask 125952
    %v177 = vsel %vm176, %v173, -inf
    %v178 = vrot.slane %v177, 4
    %v179 = vmax.f32 %v177, %v178
    %v180 = vrot.slane %v179, 2
    %v181 = vmax.f32 %v179, %v180
    %v182 = vrot.slane %v181, 1
    %v183 = vmax.f32 %v181, %v182
    %v184 = vsel %vm176, %v175, -inf
    %v185 = vrot.slane %v184, 4
    %v186 = vmax.f32 %v184, %v185
    %v187 = vrot.slane %v186, 2
    %v188 = vmax.f32 %v186, %v187
    %v189 = vrot.slane %v188, 1
    %v190 = vmax.f32 %v188, %v189
    %v191 = vlaneseq
    %v192 = vshrl.u32 %v191, 7
    %v193 = vmul.u32 %v192, 8
    %v194 = vadd.s32 %v193, %v58
    %v195 = vadd.s32 %v193, %v59
    %vm196 = vcmp.eq.f32.partialorder %v173, %v183
    %vm197 = vcmp.eq.f32.partialorder %v175, %v190
    %198 = vset.pattern.permute.xlu0 4
    %199 = vperm.xlu0 %198, %v194
    %v200 = vpop.permute.xlu0 %199
    %201 = vset.pattern.permute.xlu0 4
    %202 = vperm.xlu0 %201, %v195
    %v203 = vpop.permute.xlu0 %202
    %v204 = vsel %vm196, %v200, 32
    %v205 = vsel %vm197, %v203, 32
    %v206 = vsel %vm176, %v204, 2147483647
    %v207 = vrot.slane %v206, 4
    %vm208 = vcmp.lt.s32.totalorder %v206, %v207
    %v209 = vsel %vm208, %v206, %v207
    %v210 = vrot.slane %v209, 2
    %vm211 = vcmp.lt.s32.totalorder %v209, %v210
    %v212 = vsel %vm211, %v209, %v210
    %v213 = vrot.slane %v212, 1
    %vm214 = vcmp.lt.s32.totalorder %v212, %v213
    %v215 = vsel %vm214, %v212, %v213
    %v216 = vsel %vm176, %v205, 2147483647
    %v217 = vrot.slane %v216, 4
    %vm218 = vcmp.lt.s32.totalorder %v216, %v217
    %v219 = vsel %vm218, %v216, %v217
    %v220 = vrot.slane %v219, 2
    %vm221 = vcmp.lt.s32.totalorder %v219, %v220
    %v222 = vsel %vm221, %v219, %v220
    %v223 = vrot.slane %v222, 1
    %vm224 = vcmp.lt.s32.totalorder %v222, %v223
    %v225 = vsel %vm224, %v222, %v223
    %v226 = vand.u32 %v215, 7
    %v227 = vand.u32 %v225, 7
    %vm228 = vcmp.gt.f32.partialorder %v183, 0.0
    %vm229 = vcmp.gt.f32.partialorder %v190, 0.0
    %vm230 = vcmask 130048
    %v231 = vsel %vm230, %v56, -inf
    %v232 = vrot.slane %v231, 4
    %v233 = vmax.f32 %v231, %v232
    %v234 = vrot.slane %v233, 2
    %v235 = vmax.f32 %v233, %v234
    %v236 = vrot.slane %v235, 1
    %v237 = vmax.f32 %v235, %v236
    %v238 = vsel %vm230, %v57, -inf
    %v239 = vrot.slane %v238, 4
    %v240 = vmax.f32 %v238, %v239
    %v241 = vrot.slane %v240, 2
    %v242 = vmax.f32 %v240, %v241
    %v243 = vrot.slane %v242, 1
    %v244 = vmax.f32 %v242, %v243
    %v245 = vsub.f32 %v56, %v237
    %v246 = vsub.f32 %v57, %v244
    %v247 = vmul.f32 %v245, 1.442695
    %v248 = vpow.pop %v247
    %v249 = vmul.f32 %v246, 1.442695
    %v250 = vpow.pop %v249
    %v251 = vsel %vm230, %v248, 0.0
    %v252 = vrot.slane %v251, 4
    %v253 = vadd.f32 %v251, %v252
    %v254 = vrot.slane %v253, 2
    %v255 = vadd.f32 %v253, %v254
    %v256 = vrot.slane %v255, 1
    %v257 = vadd.f32 %v255, %v256
    %v258 = vsel %vm230, %v250, 0.0
    %v259 = vrot.slane %v258, 4
    %v260 = vadd.f32 %v258, %v259
    %v261 = vrot.slane %v260, 2
    %v262 = vadd.f32 %v260, %v261
    %v263 = vrot.slane %v262, 1
    %v264 = vadd.f32 %v262, %v263
    %v265 = vlog2.pop %v257
    %v266 = vmul.f32 %v265, 0.6931472
    %v267 = vlog2.pop %v264
    %v268 = vmul.f32 %v267, 0.6931472
    %v269 = vadd.f32 %v237, %v266
    %v270 = vadd.f32 %v244, %v268
    %vm271 = vcmp.eq.s32.totalorder %v192, %v226
    %vm272 = vcmp.eq.s32.totalorder %v192, %v227
    %v273 = vsel %vm271, %v56, 0.0
    %v274 = vsel %vm272, %v57, 0.0
    %v275 = vsel %vm230, %v273, 0.0
    %v276 = vrot.slane %v275, 4
    %v277 = vadd.f32 %v275, %v276
    %v278 = vrot.slane %v277, 2
    %v279 = vadd.f32 %v277, %v278
    %v280 = vrot.slane %v279, 1
    %v281 = vadd.f32 %v279, %v280
    %v282 = vsel %vm230, %v274, 0.0
    %v283 = vrot.slane %v282, 4
    %v284 = vadd.f32 %v282, %v283
    %v285 = vrot.slane %v284, 2
    %v286 = vadd.f32 %v284, %v285
    %v287 = vrot.slane %v286, 1
    %v288 = vadd.f32 %v286, %v287
    %v289 = vsub.f32 %v269, %v281
    %v290 = vsub.f32 %v270, %v288
    %v291 = vsel %vm228, %v289, 0.0
    %v292 = vsel %vm229, %v290, 0.0
    %v293 = vsel %vm230, %v291, 0.0
    %294 = vadd.xlane.f32.xlu0 %v293
    %v295 = vpop.xlane.xlu0 %294
    %v296 = vsel %vm230, %v292, 0.0
    %297 = vadd.xlane.f32.xlu0 %v296
    %v298 = vpop.xlane.xlu0 %297
    %vm301 = vcmask 1041409
    %v302 = vsel %vm301, %v298, %v295
    %vm304 = vcmask 1024
    %305 = vst.msk [vmem:[%s3] sm:$0x3] %vm304, %v302
    // Predicated region
    $region26: #{tpu_custom_call.1} parent=1 // pred_check
      _
    $region27: #{tpu_custom_call.1} parent=1 // pred_check_branch
      %307 = sbr.rel (0) target = $region29
    $region28: #{tpu_custom_call.1} parent=1 // pred_region
      _
    $region29: #{tpu_custom_call.1} parent=1 // pred_fallthru
      _
    // Predicated region
    $region30: #{tpu_custom_call.1} parent=1 // pred_check
      _
    $region31: #{tpu_custom_call.1} parent=1 // pred_check_branch
      %309 = sbr.rel (0) target = $region33
    $region32: #{tpu_custom_call.1} parent=1 // pred_region
      _
    $region33: #{tpu_custom_call.1} parent=1 // pred_fallthru
      _
    %310 = vsyncpa [#allocation3], 1
    %311 = vsyncpa [#allocation5], 1

</llo_original>
